<compile_context>
chip_gen: v7x
topology: tpu7x:2x2x1
jax: 0.10.0
libtpu: 0.0.40
codegen_flags: <defaults>
</compile_context>

<pallas_src>
import jax
import jax.numpy as jnp
from jax.experimental import pallas as pl
from jax.experimental.pallas import tpu as pltpu

_MAX_DMA_CHUNKS = 8                          # max concurrent DMA descriptors
_MIN_CHUNK_BYTES = 4 * 1024 * 1024           # don't split below ~4 MiB / DMA
_DEFAULT_MIN_KERNEL_BYTES = 1 * 1024 * 1024  # short-circuit tensors < 1 MiB


def _chunks_along_axis0(dim0, bytes_per_slice, align):
    """Static (start, size) chunks along axis 0.

    Large arrays are split into a few independent DMAs (each >= _MIN_CHUNK_BYTES,
    chunk boundaries aligned to `align` rows so 2-D splits stay sublane-tile
    aligned); small arrays use a single whole-array DMA.
    """
    total = dim0 * bytes_per_slice
    if dim0 < 2 * align or total < 2 * _MIN_CHUNK_BYTES:
        return ((0, dim0),)
    n = int(min(_MAX_DMA_CHUNKS, dim0 // align, max(1, total // _MIN_CHUNK_BYTES)))
    if n <= 1:
        return ((0, dim0),)
    base = -(-dim0 // n)                 # ceil(dim0 / n)
    base = -(-base // align) * align     # round up to an aligned row count
    chunks, start = [], 0
    while start < dim0:
        size = min(base, dim0 - start)
        chunks.append((start, size))
        start += size
    return tuple(chunks)


def _make_dma_copy_kernel(chunks):
    """HBM->HBM identity copy: start all chunk DMAs, then wait on all of them."""
    n = len(chunks)

    def kernel(x_hbm, o_hbm, sems):
        descs = []
        for idx, (start, size) in enumerate(chunks):
            if n == 1:
                src, dst = x_hbm, o_hbm
            else:
                src = x_hbm.at[pl.ds(start, size)]
                dst = o_hbm.at[pl.ds(start, size)]
            d = pltpu.make_async_copy(src, dst, sems.at[idx])
            d.start()
            descs.append(d)
        for d in descs:          # all DMAs in flight before the first wait
            d.wait()

    return kernel


def quant_dequant_none(x, *, donate=False,
                       min_kernel_bytes=_DEFAULT_MIN_KERNEL_BYTES):
    """Identity forward of QuantDequantNone, executed as an HBM->HBM DMA copy.

    Preserves shape and dtype exactly (no quantization, no dequantization).
    Tensors smaller than `min_kernel_bytes` are returned as-is (the identity
    is free; launch overhead is not).
    """
    if x.ndim == 0 or x.size == 0:
        return x

    # TODO(synk): jnp.dtype(...).itemsize rounds sub-byte dtypes (int4/fp4) up
    # to 1 byte; this only affects the chunk-size heuristic, not correctness.
    itemsize = jnp.dtype(x.dtype).itemsize
    nbytes = x.size * itemsize
    if nbytes < min_kernel_bytes:
        return x

    dim0 = x.shape[0]
    bytes_per_slice = (x.size // dim0) * itemsize
    if x.ndim == 1:
        # 1-D splits could land mid lane-tile; a single DMA is always safe.
        chunks = ((0, dim0),)
    elif x.ndim == 2:
        # Axis 0 is the sublane axis: keep chunk boundaries sublane-tile aligned.
        align = max(8, 32 // max(1, itemsize))
        chunks = _chunks_along_axis0(dim0, bytes_per_slice, align)
    else:
        # Axis 0 is outside the (8,128)-tiled trailing dims: any split is aligned.
        chunks = _chunks_along_axis0(dim0, bytes_per_slice, 1)

    call = pl.pallas_call(
        _make_dma_copy_kernel(chunks),
        out_shape=jax.ShapeDtypeStruct(x.shape, x.dtype),
        in_specs=[pl.BlockSpec(memory_space=pl.ANY)],   # raw HBM ref, no auto-DMA
        out_specs=pl.BlockSpec(memory_space=pl.ANY),    # raw HBM ref, no auto-DMA
        scratch_shapes=[pltpu.SemaphoreType.DMA((len(chunks),))],
        # Pure memory traffic: 0 flops, one read + one write of the tensor.
        cost_estimate=pl.CostEstimate(
            flops=0, transcendentals=0, bytes_accessed=2 * nbytes),
        # Alias only when the caller actually donates x; otherwise XLA would
        # insert a defensive full copy of the operand before the call.
        input_output_aliases=({0: 0} if donate else {}),
    )
    return call(x)


class QuantDequantNone:
    """JAX/Pallas counterpart of the PyTorch QuantDequantNone module."""

    def __init__(self, lp_dtype, hp_dtype="", *args, **kwargs):
        self.lp_dtype = lp_dtype
        self.hp_dtype = hp_dtype
        self.scale_format = kwargs.get("scale_format", "CONST")
        # forward is a no-op; in production the true optimum is `return x`
        # (zero bytes moved).  use_pallas / min_kernel_bytes / donate let the
        # DMA-copy kernel be exercised and tuned explicitly.
        self.use_pallas = kwargs.get("use_pallas", True)
        self.donate = kwargs.get("donate", False)
        self.min_kernel_bytes = kwargs.get("min_kernel_bytes",
                                           _DEFAULT_MIN_KERNEL_BYTES)

    def __call__(self, *args, **kwargs):
        x = args[0]
        if not self.use_pallas:
            return x
        return quant_dequant_none(x, donate=self.donate,
                                  min_kernel_bytes=self.min_kernel_bytes)

    def extra_repr(self):
        return (f"lp_dtype={self.lp_dtype}, hp_dtype={self.hp_dtype}, "
                f"doesn't quantize nor dequantize")


if __name__ == "__main__":
    # min_kernel_bytes=0 forces the Pallas DMA-copy path even on the small
    # demo tensors (the production default short-circuits anything < 1 MiB).
    mod = QuantDequantNone("fp8_e4m3", "bf16", min_kernel_bytes=0)

    # Conv-style activation: NCHW = (2, 4, 16, 16), f32.
    x = jax.random.normal(jax.random.PRNGKey(0), (2, 4, 16, 16), dtype=jnp.float32)
    y = jax.block_until_ready(mod(x))
    assert y.shape == x.shape, (y.shape, x.shape)
    assert y.dtype == x.dtype, (y.dtype, x.dtype)
    assert bool(jnp.array_equal(y, x)), "identity forward mismatch (f32)"

    # Non-aligned bf16 shape: exercises a whole-array DMA on an odd-shaped ref.
    x2 = jax.random.normal(jax.random.PRNGKey(1), (3, 5, 17), dtype=jnp.bfloat16)
    y2 = jax.block_until_ready(mod(x2))
    assert y2.shape == x2.shape and y2.dtype == x2.dtype
    assert bool(jnp.array_equal(y2, x2)), "identity forward mismatch (bf16)"

    # Production-default module: small tensors short-circuit, still exact identity.
    mod_prod = QuantDequantNone("fp8_e4m3", "bf16")
    x3 = jax.random.normal(jax.random.PRNGKey(2), (8, 32), dtype=jnp.float32)
    y3 = jax.block_until_ready(mod_prod(x3))
    assert y3.shape == x3.shape and y3.dtype == x3.dtype
    assert bool(jnp.array_equal(y3, x3)), "identity forward mismatch (short-circuit)"

    print("KERNEL_OK")
</pallas_src>

<mosaic_0001>
module attributes {stable_mosaic.version = 11 : i64} {
  func.func @kernel(%arg0: memref<2x4x16x16xf32, #tpu.memory_space<any>>, %arg1: memref<2x4x16x16xf32, #tpu.memory_space<any>>, %arg2: memref<1x!tpu.dma_semaphore, #tpu.memory_space<semaphore_mem>>) attributes {dimension_semantics = [], scalar_prefetch = 0 : i64, scratch_operands = 1 : i64, tpu.core_type = #tpu.core_type<tc>} {
    %c0_i32 = arith.constant 0 : i32
    %0 = tpu.memref_slice %arg2[%c0_i32] : memref<1x!tpu.dma_semaphore, #tpu.memory_space<semaphore_mem>> -> memref<1x!tpu.dma_semaphore, #tpu.memory_space<semaphore_mem>>
    %1 = tpu.memref_squeeze %0 : memref<1x!tpu.dma_semaphore, #tpu.memory_space<semaphore_mem>> -> memref<!tpu.dma_semaphore, #tpu.memory_space<semaphore_mem>>
    tpu.enqueue_dma source(%arg0 : memref<2x4x16x16xf32, #tpu.memory_space<any>>) target(%arg1 : memref<2x4x16x16xf32, #tpu.memory_space<any>>) target_semaphore(%1 : memref<!tpu.dma_semaphore, #tpu.memory_space<semaphore_mem>>)
    %c0_i32_0 = arith.constant 0 : i32
    %2 = tpu.memref_slice %arg2[%c0_i32_0] : memref<1x!tpu.dma_semaphore, #tpu.memory_space<semaphore_mem>> -> memref<1x!tpu.dma_semaphore, #tpu.memory_space<semaphore_mem>>
    %3 = tpu.memref_squeeze %2 : memref<1x!tpu.dma_semaphore, #tpu.memory_space<semaphore_mem>> -> memref<!tpu.dma_semaphore, #tpu.memory_space<semaphore_mem>>
    tpu.wait_dma2 semaphore(%3 : memref<!tpu.dma_semaphore, #tpu.memory_space<semaphore_mem>>) src(%arg0 : memref<2x4x16x16xf32, #tpu.memory_space<any>>) dst(%arg1 : memref<2x4x16x16xf32, #tpu.memory_space<any>>)
    return
  }
}

</mosaic_0001>

<llo_original>
// kernel: tpu_custom_call.1
$region0: #{tpu_custom_call.1}
  #allocation0 [shape = 'u32[]', space=smem, size = 0x4, offset = 0x4, fixed_abs, tag = 'smem constant byte address 0x4 - core index']
  #allocation1 [shape = 'u32[144,128]{1,0:T(1,128)}', space=vmem, size = 0x12000, scoped, tag = 'internal scratch']
  #allocation2 [shape = 's32[1]{0}', space=sflag, size = 0x4, scoped, tag = 'scratch operand']
  #allocation3 [shape = 's32[]', space=sflag, size = 0x4, offset = 0, fixed_abs, tag = 'sflag constant byte address 0x0 - dummy sync flag']
  #allocation4 [shape = 'u32[0]{0}', space=smem, size = 0, offset = 0, fixed_abs, tag = 'smem constant byte address 0x0 - null']
  %s0 = inlined_call_operand.hbm [shape: f32[2,4,16,16], index: 0, kind: input, shape index: {}]
  %s1 = inlined_call_operand.hbm [shape: f32[2,4,16,16], index: 1, kind: output, shape index: {}]
  %s2 = sld [smem:[#allocation0]]
  $region2: #{tpu_custom_call.1} parent=0
    _
  %s4 = ssub.s32 1, %s2
  %s5 = scalar_select 0, %s4, %s2
  %s7 = sshll.u32 1, 14
  %s8 = sxor.u32 4294967295, %s7
  %s11 = sshll.u32 3, 24
  %s12 = sxor.u32 4294967295, %s11
  %s13 = sand.u32 0, %s12
  %s15 = sor.u32 %s13, 0
  %18 = dma.general %s0, 2048, %s1, [#allocation2], [#allocation3], [#allocation4], %s15, 0
  %s19 = smul.u32 2, 4
  %s20 = smul.u32 %s19, 16
  %s21 = smul.u32 %s20, 1
  %s22 = sshll.u32 %s21, 4
  %23 = dma.done [#allocation2], %s22
  %24 = vsyncmov [#allocation2]
  %s25 = vpop.sfrf %24
  %p26 = scmp.eq.s32.totalorder %s25, 0
  %p27 = pneg %p26
  %29 = shalt.err (%p27)

</llo_original>
